<compile_context>
chip_gen: v6e
topology: v6e:2x2x1
jax: 0.10.0
libtpu: 0.0.40
codegen_flags: <defaults>
</compile_context>

<pallas_src>
import numpy as np
import jax
import jax.numpy as jnp
from jax import lax
from jax.experimental import pallas as pl
from jax.experimental.pallas import tpu as pltpu

_BN_EPS = 1e-5


# ----------------------------- Pallas kernel -------------------------------

def _make_decoder_kernel(batch, max_c, layer_num, hidden_channels, cout_final, eps):
    """Fused ConvDecoder kernel.

    Activation layout inside the kernel: a 2-D f32 array of shape
    (n_streams * 4 * batch, channels); row  s*(4*batch) + j*batch + b  holds
    the activation of batch element b at sequence position p = j*n_streams + s
    with channels on lanes.  Each ConvTranspose1d doubles n_streams.
    """

    def kernel(*refs):
        z_ref, wlin_ref, blin_ref = refs[:3]
        o_ref = refs[-1]
        params = refs[3:-1]

        # ---- Linear + ReLU (whole batch in one MXU matmul) ----
        h = jnp.dot(z_ref[...], wlin_ref[...], preferred_element_type=jnp.float32)
        h = jnp.maximum(h + blin_ref[...], 0.0)                         # (B, 4*maxC)
        # Initial stream form (1 stream, 4 positions).  wlin columns were
        # pre-permuted so column block j holds all channels of position j.
        x = jnp.concatenate(
            [h[:, j * max_c:(j + 1) * max_c] for j in range(4)], axis=0)  # (4B, maxC)

        rps = 4 * batch                                                  # rows / stream

        def conv_transpose(x_act, w_all_ref, b_ref, cout, n_streams):
            """ConvTranspose1d(k=4, s=2, p=1) in stream form.

            x_act: (n_streams*rps, cin) -> (2*n_streams*rps, cout).
            """
            # One fused matmul over all 4 taps / streams / batch elements.
            t_all = jnp.dot(x_act, w_all_ref[...],
                            preferred_element_type=jnp.float32)          # (R, 4*cout)
            t = [t_all[:, k * cout:(k + 1) * cout] for k in range(4)]
            zero_blk = jnp.zeros((batch, cout), jnp.float32)
            outs = []
            for u in range(n_streams):
                lo = u * rps
                hi = lo + rps
                # output stream 2u:  T1[stream u] + T3[previous position]
                t1u = t[1][lo:hi]
                if u > 0:
                    t3p = t[3][lo - rps:lo]
                else:
                    last = t[3][(n_streams - 1) * rps:n_streams * rps]
                    t3p = jnp.concatenate([zero_blk, last[:rps - batch]], axis=0)
                outs.append(t1u + t3p)
                # output stream 2u+1:  T2[stream u] + T0[next position]
                t2u = t[2][lo:hi]
                if u < n_streams - 1:
                    t0n = t[0][hi:hi + rps]
                else:
                    first = t[0][0:rps]
                    t0n = jnp.concatenate([first[batch:], zero_blk], axis=0)
                outs.append(t2u + t0n)
            return jnp.concatenate(outs, axis=0) + b_ref[...]

        n_streams = 1
        for li in range(layer_num):
            w_all_ref, b_ref, g_ref, beta_ref = params[4 * li:4 * li + 4]
            cout = hidden_channels[li]
            y = conv_transpose(x, w_all_ref, b_ref, cout, n_streams)
            n_streams *= 2
            # BatchNorm1d, training-mode batch statistics (biased variance),
            # one pass over all (batch, position) rows.
            inv_n = 1.0 / float(y.shape[0])
            mean = jnp.sum(y, axis=0, keepdims=True) * inv_n
            var = jnp.sum(y * y, axis=0, keepdims=True) * inv_n - mean * mean
            scale = lax.rsqrt(var + eps) * g_ref[...]
            shift = beta_ref[...] - mean * scale
            x = jnp.maximum(y * scale + shift, 0.0)

        # final ConvTranspose1d + Tanh
        wf_ref, bf_ref = params[4 * layer_num:4 * layer_num + 2]
        y = conv_transpose(x, wf_ref, bf_ref, cout_final, n_streams)
        o_ref[...] = jnp.tanh(y).astype(o_ref.dtype)

    return kernel


# ------------------------------ JAX wrapper --------------------------------

def conv_decoder_forward(z, params, eps=_BN_EPS):
    """z: (B, latent) -> (B, input_channel, data_size) (PyTorch NCL layout)."""
    B, latent = z.shape
    max_c = params["max_channel_num"]
    conv_layers = params["conv_layers"]
    layer_num = len(conv_layers)

    # Fold torch's `.view(-1, maxC, 4)` into the Linear weight/bias column order.
    w_lin = params["w_lin"]                                   # (latent, 4*maxC)
    b_lin = params["b_lin"]                                   # (1, 4*maxC)
    w_lin_p = w_lin.reshape(latent, max_c, 4).transpose(0, 2, 1).reshape(latent, 4 * max_c)
    b_lin_p = b_lin.reshape(1, max_c, 4).transpose(0, 2, 1).reshape(1, 4 * max_c)

    flat_inputs = [z, w_lin_p, b_lin_p]
    hidden_channels = []
    for (w, b, g, be) in conv_layers:
        cin, cout = w.shape[1], w.shape[2]
        hidden_channels.append(cout)
        # fuse the 4 taps:  W_all[:, k*cout + co] = w[k, :, co]
        w_all = jnp.transpose(w, (1, 0, 2)).reshape(cin, 4 * cout)
        flat_inputs += [w_all, b, g, be]
    wf, bf = params["final_layer"]
    cin_f, cout_f = wf.shape[1], wf.shape[2]
    wf_all = jnp.transpose(wf, (1, 0, 2)).reshape(cin_f, 4 * cout_f)
    flat_inputs += [wf_all, bf]

    s_final = 2 ** (layer_num + 1)             # number of final output streams
    rows_out = s_final * 4 * B                 # = B * data_size
    data_size = 4 * s_final

    # VMEM budget from the actual footprint, clamped to be valid on every gen.
    # TODO(synk): for data_size >~ 1024, tile the first-layer weight over Cout
    # (grid axis) so it fits v7x's 64 MiB VMEM and both TensorCores are used.
    param_bytes = sum(int(a.size) * 4 for a in flat_inputs) + rows_out * cout_f * 4
    act_bytes = (layer_num + 2) * 8 * B * max_c * 4
    vmem_limit = int(min(48 * 1024 * 1024,
                         max(32 * 1024 * 1024, 4 * (param_bytes + act_bytes))))

    kernel = _make_decoder_kernel(B, max_c, layer_num, hidden_channels, cout_f, eps)
    out2d = pl.pallas_call(
        kernel,
        out_shape=jax.ShapeDtypeStruct((rows_out, cout_f), jnp.float32),
        in_specs=[pl.BlockSpec(memory_space=pltpu.MemorySpace.VMEM)] * len(flat_inputs),
        out_specs=pl.BlockSpec(memory_space=pltpu.MemorySpace.VMEM),
        compiler_params=pltpu.CompilerParams(vmem_limit_bytes=vmem_limit),
    )(*flat_inputs)

    # De-interleave the polyphase streams (pure layout plumbing on HBM):
    # row s*(4B) + j*B + b, channel c  <->  output[b, c, j*s_final + s].
    out = out2d.reshape(s_final, 4, B, cout_f)
    out = jnp.transpose(out, (2, 3, 1, 0)).reshape(B, cout_f, data_size)
    return out


def init_params(key, data_size, input_channel, latent_size):
    layer_num = int(np.log2(data_size)) - 3
    maxC = data_size * 2
    final_size = 4
    n_conv = layer_num + 1
    keys = jax.random.split(key, 2 + 2 * n_conv)
    ki = iter(keys)

    # torch Linear weight is (out, in); we store its transpose.
    w_lin = jax.random.normal(next(ki), (latent_size, final_size * maxC), jnp.float32) * 0.1
    b_lin = jax.random.normal(next(ki), (1, final_size * maxC), jnp.float32) * 0.1

    conv_layers = []
    prev = maxC
    for i in range(layer_num):
        cout = maxC // (2 ** (i + 1))
        # w[k, cin, cout] corresponds to torch ConvTranspose1d weight[cin, cout, k]
        w = jax.random.normal(next(ki), (4, prev, cout), jnp.float32) * 0.1
        b = jax.random.normal(next(ki), (1, cout), jnp.float32) * 0.1
        g = jnp.ones((1, cout), jnp.float32)     # BatchNorm default init
        be = jnp.zeros((1, cout), jnp.float32)
        conv_layers.append((w, b, g, be))
        prev = cout

    wf = jax.random.normal(next(ki), (4, prev, input_channel), jnp.float32) * 0.1
    bf = jax.random.normal(next(ki), (1, input_channel), jnp.float32) * 0.1

    return {"w_lin": w_lin, "b_lin": b_lin, "conv_layers": conv_layers,
            "final_layer": (wf, bf), "max_channel_num": maxC}


# -------------------------- pure-numpy reference ----------------------------

def reference_forward(z, params):
    z = np.asarray(z, np.float32)
    w_lin = np.asarray(params["w_lin"])
    b_lin = np.asarray(params["b_lin"])[0]
    h = np.maximum(z @ w_lin + b_lin, 0.0)
    B = z.shape[0]
    maxC = params["max_channel_num"]
    x = h.reshape(B, maxC, 4)  # NCL, exactly torch's .view(-1, maxC, 4)

    def convT(x, w, b):  # x (B, Cin, Lin) NCL; w (4, Cin, Cout); b (Cout,)
        B_, _, Lin = x.shape
        Cout = w.shape[2]
        Lout = 2 * Lin
        out = np.tile(b[None, :, None], (B_, 1, Lout)).astype(np.float32)
        for i in range(Lin):
            for k in range(4):
                t = 2 * i + k - 1
                if 0 <= t < Lout:
                    out[:, :, t] += np.einsum('bc,co->bo', x[:, :, i], w[k])
        return out

    for (w, b, g, be) in params["conv_layers"]:
        y = convT(x, np.asarray(w), np.asarray(b)[0])
        mean = y.mean(axis=(0, 2), keepdims=True)
        var = y.var(axis=(0, 2), keepdims=True)  # biased, like torch BN (training)
        y = (y - mean) / np.sqrt(var + _BN_EPS)
        y = y * np.asarray(g)[0][None, :, None] + np.asarray(be)[0][None, :, None]
        x = np.maximum(y, 0.0)

    wf, bf = params["final_layer"]
    y = convT(x, np.asarray(wf), np.asarray(bf)[0])
    return np.tanh(y)


# ---------------------------------- main ------------------------------------

if __name__ == "__main__":
    data_size, input_channel, latent_size, batch = 16, 4, 32, 2
    key = jax.random.PRNGKey(0)
    kp, kz = jax.random.split(key)
    params = init_params(kp, data_size, input_channel, latent_size)
    z = jax.random.normal(kz, (batch, latent_size), jnp.float32)

    out = conv_decoder_forward(z, params)
    out = jax.block_until_ready(out)

    assert out.shape == (batch, input_channel, data_size), out.shape
    ref = reference_forward(np.asarray(z), params)
    np.testing.assert_allclose(np.asarray(out), ref, rtol=1e-3, atol=1e-3)
    print("KERNEL_OK")
</pallas_src>

<mosaic_0001>
module attributes {stable_mosaic.version = 11 : i64} {
  func.func @kernel(%arg0: memref<2x32xf32, #tpu.memory_space<vmem>>, %arg1: memref<32x128xf32, #tpu.memory_space<vmem>>, %arg2: memref<1x128xf32, #tpu.memory_space<vmem>>, %arg3: memref<32x64xf32, #tpu.memory_space<vmem>>, %arg4: memref<1x16xf32, #tpu.memory_space<vmem>>, %arg5: memref<1x16xf32, #tpu.memory_space<vmem>>, %arg6: memref<1x16xf32, #tpu.memory_space<vmem>>, %arg7: memref<16x16xf32, #tpu.memory_space<vmem>>, %arg8: memref<1x4xf32, #tpu.memory_space<vmem>>, %arg9: memref<32x4xf32, #tpu.memory_space<vmem>>) attributes {dimension_semantics = [], scalar_prefetch = 0 : i64, scratch_operands = 0 : i64, tpu.core_type = #tpu.core_type<tc>} {
    %c0 = arith.constant 0 : index
    %c0_0 = arith.constant 0 : index
    %0 = vector.load %arg0[%c0, %c0_0] : memref<2x32xf32, #tpu.memory_space<vmem>>, vector<2x32xf32>
    %c0_1 = arith.constant 0 : index
    %c0_2 = arith.constant 0 : index
    %1 = vector.load %arg1[%c0_1, %c0_2] : memref<32x128xf32, #tpu.memory_space<vmem>>, vector<32x128xf32>
    %cst = arith.constant dense<0.000000e+00> : vector<2x128xf32>
    %2 = tpu.matmul %0, %1, %cst {dimension_numbers = #tpu.dot_dimension_numbers<[1], [0], [0], [1], [0, 0, 1, 1], [], []>} : vector<2x32xf32>, vector<32x128xf32>, vector<2x128xf32> -> vector<2x128xf32>
    %c0_3 = arith.constant 0 : index
    %c0_4 = arith.constant 0 : index
    %3 = vector.load %arg2[%c0_3, %c0_4] : memref<1x128xf32, #tpu.memory_space<vmem>>, vector<1x128xf32>
    %4 = vector.broadcast %3 : vector<1x128xf32> to vector<2x128xf32>
    %5 = arith.addf %2, %4 : vector<2x128xf32>
    %cst_5 = arith.constant 0.000000e+00 : f32
    %6 = vector.broadcast %cst_5 : f32 to vector<2x128xf32>
    %7 = arith.maximumf %5, %6 : vector<2x128xf32>
    %8 = vector.extract_strided_slice %7 {offsets = [0, 0], sizes = [2, 32], strides = [1, 1]} : vector<2x128xf32> to vector<2x32xf32>
    %9 = vector.extract_strided_slice %7 {offsets = [0, 32], sizes = [2, 32], strides = [1, 1]} : vector<2x128xf32> to vector<2x32xf32>
    %10 = vector.extract_strided_slice %7 {offsets = [0, 64], sizes = [2, 32], strides = [1, 1]} : vector<2x128xf32> to vector<2x32xf32>
    %11 = vector.extract_strided_slice %7 {offsets = [0, 96], sizes = [2, 32], strides = [1, 1]} : vector<2x128xf32> to vector<2x32xf32>
    %12 = tpu.concatenate %8, %9, %10, %11 in 0 : vector<2x32xf32>, vector<2x32xf32>, vector<2x32xf32>, vector<2x32xf32> -> vector<8x32xf32>
    %c0_6 = arith.constant 0 : index
    %c0_7 = arith.constant 0 : index
    %13 = vector.load %arg3[%c0_6, %c0_7] : memref<32x64xf32, #tpu.memory_space<vmem>>, vector<32x64xf32>
    %cst_8 = arith.constant dense<0.000000e+00> : vector<8x64xf32>
    %14 = tpu.matmul %12, %13, %cst_8 {dimension_numbers = #tpu.dot_dimension_numbers<[1], [0], [0], [1], [0, 0, 1, 1], [], []>} : vector<8x32xf32>, vector<32x64xf32>, vector<8x64xf32> -> vector<8x64xf32>
    %15 = vector.extract_strided_slice %14 {offsets = [0, 0], sizes = [8, 16], strides = [1, 1]} : vector<8x64xf32> to vector<8x16xf32>
    %16 = vector.extract_strided_slice %14 {offsets = [0, 16], sizes = [8, 16], strides = [1, 1]} : vector<8x64xf32> to vector<8x16xf32>
    %17 = vector.extract_strided_slice %14 {offsets = [0, 32], sizes = [8, 16], strides = [1, 1]} : vector<8x64xf32> to vector<8x16xf32>
    %18 = vector.extract_strided_slice %14 {offsets = [0, 48], sizes = [8, 16], strides = [1, 1]} : vector<8x64xf32> to vector<8x16xf32>
    %cst_9 = arith.constant 0.000000e+00 : f32
    %19 = vector.broadcast %cst_9 : f32 to vector<2x16xf32>
    %20 = vector.extract_strided_slice %18 {offsets = [0, 0], sizes = [6, 16], strides = [1, 1]} : vector<8x16xf32> to vector<6x16xf32>
    %21 = tpu.concatenate %19, %20 in 0 : vector<2x16xf32>, vector<6x16xf32> -> vector<8x16xf32>
    %22 = arith.addf %16, %21 : vector<8x16xf32>
    %23 = vector.extract_strided_slice %15 {offsets = [2, 0], sizes = [6, 16], strides = [1, 1]} : vector<8x16xf32> to vector<6x16xf32>
    %24 = tpu.concatenate %23, %19 in 0 : vector<6x16xf32>, vector<2x16xf32> -> vector<8x16xf32>
    %25 = arith.addf %17, %24 : vector<8x16xf32>
    %26 = tpu.concatenate %22, %25 in 0 : vector<8x16xf32>, vector<8x16xf32> -> vector<16x16xf32>
    %c0_10 = arith.constant 0 : index
    %c0_11 = arith.constant 0 : index
    %27 = vector.load %arg4[%c0_10, %c0_11] : memref<1x16xf32, #tpu.memory_space<vmem>>, vector<1x16xf32>
    %28 = vector.broadcast %27 : vector<1x16xf32> to vector<16x16xf32>
    %29 = arith.addf %26, %28 : vector<16x16xf32>
    %cst_12 = arith.constant dense<0.000000e+00> : vector<16xf32>
    %30 = vector.multi_reduction <add>, %29, %cst_12 [0] : vector<16x16xf32> to vector<16xf32>
    %31 = vector.shape_cast %30 : vector<16xf32> to vector<1x16xf32>
    %cst_13 = arith.constant 6.250000e-02 : f32
    %32 = vector.broadcast %cst_13 : f32 to vector<1x16xf32>
    %33 = arith.mulf %31, %32 : vector<1x16xf32>
    %34 = arith.mulf %29, %29 : vector<16x16xf32>
    %cst_14 = arith.constant dense<0.000000e+00> : vector<16xf32>
    %35 = vector.multi_reduction <add>, %34, %cst_14 [0] : vector<16x16xf32> to vector<16xf32>
    %36 = vector.shape_cast %35 : vector<16xf32> to vector<1x16xf32>
    %cst_15 = arith.constant 6.250000e-02 : f32
    %37 = vector.broadcast %cst_15 : f32 to vector<1x16xf32>
    %38 = arith.mulf %36, %37 : vector<1x16xf32>
    %39 = arith.mulf %33, %33 : vector<1x16xf32>
    %40 = arith.subf %38, %39 : vector<1x16xf32>
    %cst_16 = arith.constant 9.99999974E-6 : f32
    %41 = vector.broadcast %cst_16 : f32 to vector<1x16xf32>
    %42 = arith.addf %40, %41 : vector<1x16xf32>
    %43 = math.rsqrt %42 : vector<1x16xf32>
    %c0_17 = arith.constant 0 : index
    %c0_18 = arith.constant 0 : index
    %44 = vector.load %arg5[%c0_17, %c0_18] : memref<1x16xf32, #tpu.memory_space<vmem>>, vector<1x16xf32>
    %45 = arith.mulf %43, %44 : vector<1x16xf32>
    %c0_19 = arith.constant 0 : index
    %c0_20 = arith.constant 0 : index
    %46 = vector.load %arg6[%c0_19, %c0_20] : memref<1x16xf32, #tpu.memory_space<vmem>>, vector<1x16xf32>
    %47 = arith.mulf %33, %45 : vector<1x16xf32>
    %48 = arith.subf %46, %47 : vector<1x16xf32>
    %49 = vector.broadcast %45 : vector<1x16xf32> to vector<16x16xf32>
    %50 = arith.mulf %29, %49 : vector<16x16xf32>
    %51 = vector.broadcast %48 : vector<1x16xf32> to vector<16x16xf32>
    %52 = arith.addf %50, %51 : vector<16x16xf32>
    %cst_21 = arith.constant 0.000000e+00 : f32
    %53 = vector.broadcast %cst_21 : f32 to vector<16x16xf32>
    %54 = arith.maximumf %52, %53 : vector<16x16xf32>
    %c0_22 = arith.constant 0 : index
    %c0_23 = arith.constant 0 : index
    %55 = vector.load %arg7[%c0_22, %c0_23] : memref<16x16xf32, #tpu.memory_space<vmem>>, vector<16x16xf32>
    %cst_24 = arith.constant dense<0.000000e+00> : vector<16x16xf32>
    %56 = tpu.matmul %54, %55, %cst_24 {dimension_numbers = #tpu.dot_dimension_numbers<[1], [0], [0], [1], [0, 0, 1, 1], [], []>} : vector<16x16xf32>, vector<16x16xf32>, vector<16x16xf32> -> vector<16x16xf32>
    %57 = vector.extract_strided_slice %56 {offsets = [0, 0], sizes = [16, 4], strides = [1, 1]} : vector<16x16xf32> to vector<16x4xf32>
    %58 = vector.extract_strided_slice %56 {offsets = [0, 4], sizes = [16, 4], strides = [1, 1]} : vector<16x16xf32> to vector<16x4xf32>
    %59 = vector.extract_strided_slice %56 {offsets = [0, 8], sizes = [16, 4], strides = [1, 1]} : vector<16x16xf32> to vector<16x4xf32>
    %60 = vector.extract_strided_slice %56 {offsets = [0, 12], sizes = [16, 4], strides = [1, 1]} : vector<16x16xf32> to vector<16x4xf32>
    %cst_25 = arith.constant 0.000000e+00 : f32
    %61 = vector.broadcast %cst_25 : f32 to vector<2x4xf32>
    %62 = vector.extract_strided_slice %58 {offsets = [0, 0], sizes = [8, 4], strides = [1, 1]} : vector<16x4xf32> to vector<8x4xf32>
    %63 = vector.extract_strided_slice %60 {offsets = [8, 0], sizes = [8, 4], strides = [1, 1]} : vector<16x4xf32> to vector<8x4xf32>
    %64 = vector.extract_strided_slice %63 {offsets = [0, 0], sizes = [6, 4], strides = [1, 1]} : vector<8x4xf32> to vector<6x4xf32>
    %65 = tpu.concatenate %61, %64 in 0 : vector<2x4xf32>, vector<6x4xf32> -> vector<8x4xf32>
    %66 = arith.addf %62, %65 : vector<8x4xf32>
    %67 = vector.extract_strided_slice %59 {offsets = [0, 0], sizes = [8, 4], strides = [1, 1]} : vector<16x4xf32> to vector<8x4xf32>
    %68 = vector.extract_strided_slice %57 {offsets = [8, 0], sizes = [8, 4], strides = [1, 1]} : vector<16x4xf32> to vector<8x4xf32>
    %69 = arith.addf %67, %68 : vector<8x4xf32>
    %70 = vector.extract_strided_slice %58 {offsets = [8, 0], sizes = [8, 4], strides = [1, 1]} : vector<16x4xf32> to vector<8x4xf32>
    %71 = vector.extract_strided_slice %60 {offsets = [0, 0], sizes = [8, 4], strides = [1, 1]} : vector<16x4xf32> to vector<8x4xf32>
    %72 = arith.addf %70, %71 : vector<8x4xf32>
    %73 = vector.extract_strided_slice %59 {offsets = [8, 0], sizes = [8, 4], strides = [1, 1]} : vector<16x4xf32> to vector<8x4xf32>
    %74 = vector.extract_strided_slice %57 {offsets = [0, 0], sizes = [8, 4], strides = [1, 1]} : vector<16x4xf32> to vector<8x4xf32>
    %75 = vector.extract_strided_slice %74 {offsets = [2, 0], sizes = [6, 4], strides = [1, 1]} : vector<8x4xf32> to vector<6x4xf32>
    %76 = tpu.concatenate %75, %61 in 0 : vector<6x4xf32>, vector<2x4xf32> -> vector<8x4xf32>
    %77 = arith.addf %73, %76 : vector<8x4xf32>
    %78 = tpu.concatenate %66, %69, %72, %77 in 0 : vector<8x4xf32>, vector<8x4xf32>, vector<8x4xf32>, vector<8x4xf32> -> vector<32x4xf32>
    %c0_26 = arith.constant 0 : index
    %c0_27 = arith.constant 0 : index
    %79 = vector.load %arg8[%c0_26, %c0_27] : memref<1x4xf32, #tpu.memory_space<vmem>>, vector<1x4xf32>
    %80 = vector.broadcast %79 : vector<1x4xf32> to vector<32x4xf32>
    %81 = arith.addf %78, %80 : vector<32x4xf32>
    %82 = math.tanh %81 : vector<32x4xf32>
    %c0_28 = arith.constant 0 : index
    %c0_29 = arith.constant 0 : index
    %83 = vector.load %arg9[%c0_28, %c0_29] : memref<32x4xf32, #tpu.memory_space<vmem>>, vector<32x4xf32>
    tpu.vector_store %arg9[%c0_28, %c0_29], %82 {strides = array<i32>} : memref<32x4xf32, #tpu.memory_space<vmem>>, vector<32x4xf32>,
    return
  }
}

</mosaic_0001>

<llo_original>
// kernel: tpu_custom_call.1
$region0: #{tpu_custom_call.1}
  #allocation0 [shape = 'u32[]', space=smem, size = 0x4, offset = 0x4, fixed_abs, tag = 'smem constant byte address 0x4 - core index']
  #allocation1 [shape = 'u32[144,128]{1,0:T(1,128)}', space=vmem, size = 0x12000, scoped, tag = 'internal scratch']
  %s0 = inlined_call_operand.hbm [shape: f32[2,32], index: 0, kind: input, shape index: {}]
  %s1 = inlined_call_operand.hbm [shape: f32[32,128], index: 1, kind: input, shape index: {}]
  %s2 = inlined_call_operand.vmem [shape: f32[1,128], index: 2, kind: input, shape index: {}]
  %s3 = inlined_call_operand.hbm [shape: f32[32,64], index: 3, kind: input, shape index: {}]
  %s4 = inlined_call_operand.vmem [shape: f32[1,16], index: 4, kind: input, shape index: {}]
  %s5 = inlined_call_operand.vmem [shape: f32[1,16], index: 5, kind: input, shape index: {}]
  %s6 = inlined_call_operand.vmem [shape: f32[1,16], index: 6, kind: input, shape index: {}]
  %s7 = inlined_call_operand.hbm [shape: f32[16,16], index: 7, kind: input, shape index: {}]
  %s8 = inlined_call_operand.vmem [shape: f32[1,4], index: 8, kind: input, shape index: {}]
  %s9 = inlined_call_operand.vmem [shape: f32[32,4], index: 9, kind: output, shape index: {}]
  %s10 = sld [smem:[#allocation0]]
  $region62: #{tpu_custom_call.1} parent=0
    _
  %s12 = ssub.s32 1, %s10
  %s13 = scalar_select 0, %s12, %s10
  $region1: #{tpu_custom_call.1} parent=0
    #allocation2 [shape = 'u8[1024]{0}', space=vmem, size = 0x400, scoped, tag = 'input window, operand 0, single buffered']
    #allocation3 [shape = 's32[1]{0}', space=sflag, size = 0x4, scoped, tag = 'scoped memory for tpu_custom_call.1']
    #allocation4 [shape = 'u8[16384]{0}', space=vmem, size = 0x4000, scoped, tag = 'input window, operand 1, single buffered']
    #allocation5 [shape = 's32[1]{0}', space=sflag, size = 0x4, scoped, tag = 'scoped memory for tpu_custom_call.1']
    #allocation6 [shape = 'u8[16384]{0}', space=vmem, size = 0x4000, scoped, tag = 'input window, operand 3, single buffered']
    #allocation7 [shape = 'u8[8192]{0}', space=vmem, size = 0x2000, scoped, tag = 'input window, operand 7, single buffered']
    #allocation8 [shape = 's32[1]{0}', space=sflag, size = 0x4, scoped, tag = 'scoped memory for tpu_custom_call.1']
    %14 = vsyncpa [#allocation3], 0
    %15 = vsyncpa [#allocation5], 0
    %16 = vsyncpa [#allocation8], 0
    // Predicated region
    $region2: #{tpu_custom_call.1} parent=1 // pred_check
      _
    $region3: #{tpu_custom_call.1} parent=1 // pred_check_branch
      %18 = sbr.rel (0) target = $region5
    $region4: #{tpu_custom_call.1} parent=1 // pred_region
      %s20 = ssub.s32 32, 32
      %21 = vsyncadd [#allocation3], %s20
      %s23 = sshll.u32 [#allocation2], 4
      %s24 = int_to_ptr.vmem [resolvable:$true] %s23
      %26 = dma.hbm_to_vmem [thread:$0]  %s0, 32, %s24, [#allocation3]
    $region5: #{tpu_custom_call.1} parent=1 // pred_fallthru
      _
    // Predicated region
    $region6: #{tpu_custom_call.1} parent=1 // pred_check
      _
    $region7: #{tpu_custom_call.1} parent=1 // pred_check_branch
      %28 = sbr.rel (0) target = $region9
    $region8: #{tpu_custom_call.1} parent=1 // pred_region
      %s30 = ssub.s32 512, 512
      %31 = vsyncadd [#allocation5], %s30
      %s32 = sshll.u32 [#allocation4], 4
      %s33 = int_to_ptr.vmem [resolvable:$true] %s32
      %38 = dma.hbm_to_vmem [thread:$0]  %s1, 512, %s33, [#allocation5], 128, 128, 8
    $region9: #{tpu_custom_call.1} parent=1 // pred_fallthru
      _
    // Predicated region
    $region10: #{tpu_custom_call.1} parent=1 // pred_check
      _
    $region11: #{tpu_custom_call.1} parent=1 // pred_check_branch
      %40 = sbr.rel (0) target = $region13
    $region12: #{tpu_custom_call.1} parent=1 // pred_region
      _
    $region13: #{tpu_custom_call.1} parent=1 // pred_fallthru
      _
    // Predicated region
    $region14: #{tpu_custom_call.1} parent=1 // pred_check
      _
    $region15: #{tpu_custom_call.1} parent=1 // pred_check_branch
      %42 = sbr.rel (0) target = $region17
    $region16: #{tpu_custom_call.1} parent=1 // pred_region
      %s44 = ssub.s32 512, 512
      %45 = vsyncadd [#allocation5], %s44
      %s46 = sshll.u32 [#allocation6], 4
      %s47 = int_to_ptr.vmem [resolvable:$true] %s46
      %52 = dma.hbm_to_vmem [thread:$0]  %s3, 512, %s47, [#allocation5], 128, 128, 8
    $region17: #{tpu_custom_call.1} parent=1 // pred_fallthru
      _
    // Predicated region
    $region18: #{tpu_custom_call.1} parent=1 // pred_check
      _
    $region19: #{tpu_custom_call.1} parent=1 // pred_check_branch
      %54 = sbr.rel (0) target = $region21
    $region20: #{tpu_custom_call.1} parent=1 // pred_region
      _
    $region21: #{tpu_custom_call.1} parent=1 // pred_fallthru
      _
    // Predicated region
    $region22: #{tpu_custom_call.1} parent=1 // pred_check
      _
    $region23: #{tpu_custom_call.1} parent=1 // pred_check_branch
      %56 = sbr.rel (0) target = $region25
    $region24: #{tpu_custom_call.1} parent=1 // pred_region
      _
    $region25: #{tpu_custom_call.1} parent=1 // pred_fallthru
      _
    // Predicated region
    $region26: #{tpu_custom_call.1} parent=1 // pred_check
      _
    $region27: #{tpu_custom_call.1} parent=1 // pred_check_branch
      %58 = sbr.rel (0) target = $region29
    $region28: #{tpu_custom_call.1} parent=1 // pred_region
      _
    $region29: #{tpu_custom_call.1} parent=1 // pred_fallthru
      _
    // Predicated region
    $region30: #{tpu_custom_call.1} parent=1 // pred_check
      _
    $region31: #{tpu_custom_call.1} parent=1 // pred_check_branch
      %60 = sbr.rel (0) target = $region33
    $region32: #{tpu_custom_call.1} parent=1 // pred_region
      %s62 = ssub.s32 256, 256
      %63 = vsyncadd [#allocation8], %s62
      %s64 = sshll.u32 [#allocation7], 4
      %s65 = int_to_ptr.vmem [resolvable:$true] %s64
      %70 = dma.hbm_to_vmem [thread:$0]  %s7, 256, %s65, [#allocation8], 128, 128, 8
    $region33: #{tpu_custom_call.1} parent=1 // pred_fallthru
      _
    // Predicated region
    $region34: #{tpu_custom_call.1} parent=1 // pred_check
      _
    $region35: #{tpu_custom_call.1} parent=1 // pred_check_branch
      %72 = sbr.rel (0) target = $region37
    $region36: #{tpu_custom_call.1} parent=1 // pred_region
      _
    $region37: #{tpu_custom_call.1} parent=1 // pred_fallthru
      _
    // Predicated region
    $region38: #{tpu_custom_call.1} parent=1 // pred_check
      _
    $region39: #{tpu_custom_call.1} parent=1 // pred_check_branch
      %74 = sbr.rel (0) target = $region41
    $region40: #{tpu_custom_call.1} parent=1 // pred_region
      %75 = dma.done [#allocation3], 32
    $region41: #{tpu_custom_call.1} parent=1 // pred_fallthru
      _
    // Predicated region
    $region42: #{tpu_custom_call.1} parent=1 // pred_check
      _
    $region43: #{tpu_custom_call.1} parent=1 // pred_check_branch
      %77 = sbr.rel (0) target = $region45
    $region44: #{tpu_custom_call.1} parent=1 // pred_region
      %78 = dma.done [#allocation5], 512
    $region45: #{tpu_custom_call.1} parent=1 // pred_fallthru
      _
    // Predicated region
    $region46: #{tpu_custom_call.1} parent=1 // pred_check
      _
    $region47: #{tpu_custom_call.1} parent=1 // pred_check_branch
      %80 = sbr.rel (0) target = $region49
    $region48: #{tpu_custom_call.1} parent=1 // pred_region
      %81 = dma.done [#allocation5], 512
    $region49: #{tpu_custom_call.1} parent=1 // pred_fallthru
      _
    // Predicated region
    $region50: #{tpu_custom_call.1} parent=1 // pred_check
      _
    $region51: #{tpu_custom_call.1} parent=1 // pred_check_branch
      %83 = sbr.rel (0) target = $region53
    $region52: #{tpu_custom_call.1} parent=1 // pred_region
      %84 = dma.done [#allocation8], 256
    $region53: #{tpu_custom_call.1} parent=1 // pred_fallthru
      _
    %v85 = vld [vmem:[#allocation2] sm:$0x3]
    %v86 = vld [vmem:[#allocation4] sm:$0xff]
    %v87 = vld [vmem:[#allocation4 + $0x8] sm:$0xff]
    %v88 = vld [vmem:[#allocation4 + $0x10] sm:$0xff]
    %v89 = vld [vmem:[#allocation4 + $0x18] sm:$0xff]
    %v90 = vld [vmem:[%s2] sm:$0x1]
    %v92 = vlaneseq
    %v93 = vshrl.u32 %v92, 7
    %v94 = vsub.s32 0, %v93
    %v95 = vrot.slane %v90, %v94
    %vm97 = vcmask 261120
    %v99 = vsel %vm97, %v85, 0
    %101 = vmatprep.subr.mxu0 0.0
    %102 = vmatpush1.msra.mxu0 0.0
    %103 = vmatprep.subr.mxu0 0.0
    %104 = vmatpush1.msra.mxu0 0.0
    %105 = vmatprep.subr.mxu0 0.0
    %106 = vmatpush1.msra.mxu0 0.0
    %107 = vmatprep.subr.mxu0 0.0
    %108 = vmatpush1.msra.mxu0 0.0
    %109 = vmatprep.subr.mxu0 0.0
    %110 = vmatpush1.msra.mxu0 0.0
    %111 = vmatprep.subr.mxu0 0.0
    %112 = vmatpush1.msra.mxu0 0.0
    %113 = vmatprep.subr.mxu0 0.0
    %114 = vmatpush1.msra.mxu0 0.0
    %115 = vmatprep.subr.mxu0 0.0
    %116 = vmatpush1.msra.mxu0 0.0
    %117 = vmatprep.subr.mxu0 0.0
    %118 = vmatpush1.msra.mxu0 0.0
    %119 = vmatprep.subr.mxu0 0.0
    %120 = vmatpush1.msra.mxu0 0.0
    %121 = vmatprep.subr.mxu0 0.0
    %122 = vmatpush1.msra.mxu0 0.0
    %123 = vmatprep.subr.mxu0 0.0
    %124 = vmatpush1.msra.mxu0 0.0
    %125 = vmatprep.subr.mxu0 0.0
    %126 = vmatpush1.msra.mxu0 %v89
    %127 = vmatprep.subr.mxu0 0.0
    %128 = vmatpush1.msra.mxu0 %v88
    %129 = vmatprep.subr.mxu0 0.0
    %130 = vmatpush1.msra.mxu0 %v87
    %131 = vmatprep.subr.mxu0 0.0
    %132 = vmatpush1.msra.mxu0 %v86
    %133 = vmatprep.subr.mxu0 0.0
    %134 = vmatpush2.msra.mxu0 0.0
    %135 = vmatprep.subr.mxu0 0.0
    %136 = vmatpush2.msra.mxu0 0.0
    %137 = vmatprep.subr.mxu0 0.0
    %138 = vmatpush2.msra.mxu0 0.0
    %139 = vmatprep.subr.mxu0 0.0
    %140 = vmatpush2.msra.mxu0 0.0
    %141 = vmatprep.subr.mxu0 0.0
    %142 = vmatpush2.msra.mxu0 0.0
    %143 = vmatprep.subr.mxu0 0.0
    %144 = vmatpush2.msra.mxu0 0.0
    %145 = vmatprep.subr.mxu0 0.0
    %146 = vmatpush2.msra.mxu0 0.0
    %147 = vmatprep.subr.mxu0 0.0
    %148 = vmatpush2.msra.mxu0 0.0
    %149 = vmatprep.subr.mxu0 0.0
    %150 = vmatpush2.msra.mxu0 0.0
    %151 = vmatprep.subr.mxu0 0.0
    %152 = vmatpush2.msra.mxu0 0.0
    %153 = vmatprep.subr.mxu0 0.0
    %154 = vmatpush2.msra.mxu0 0.0
    %155 = vmatprep.subr.mxu0 0.0
    %156 = vmatpush2.msra.mxu0 0.0
    %157 = vmatprep.subr.mxu0 0.0
    %158 = vmatpush2.msra.mxu0 0.0
    %159 = vmatprep.subr.mxu0 0.0
    %160 = vmatpush2.msra.mxu0 0.0
    %161 = vmatprep.subr.mxu0 0.0
    %162 = vmatpush2.msra.mxu0 0.0
    %163 = vmatprep.subr.mxu0 0.0
    %164 = vmatpush2.msra.mxu0 0.0
    %165 = vmatprep.mubr.f32.mxu0 0.0
    %166 = vmatmul.mubr.f32.gmra.mxu0 %v99
    %v167 = vpop.f32.mrf.mxu0
    %v168 = vadd.f32 %v95, %v167
    %v169 = vpop.f32.mrf.mxu0
    %170 = vdwg.mxu0
    %v171 = vmax.f32 %v168, 0.0
    %v173 = vrot.slane %v171, 6
    %174 = vrot.lane.b32.xlu0 %v173, 96
    %v175 = vpop.permute.xlu0 %174
    %v177 = vrot.slane %v171, 4
    %178 = vrot.lane.b32.xlu0 %v177, 64
    %v179 = vpop.permute.xlu0 %178
    %v181 = vrot.slane %v171, 2
    %182 = vrot.lane.b32.xlu0 %v181, 32
    %v183 = vpop.permute.xlu0 %182
    %vm185 = vcmask 1041408
    %v186 = vsel %vm185, %v171, %v175
    %vm187 = vcmask 1043456
    %v188 = vsel %vm187, %v186, %v179
    %vm189 = vcmask 1045504
    %v190 = vsel %vm189, %v188, %v183
    %v191 = vld [vmem:[#allocation6] sm:$0xff]
    %v192 = vld [vmem:[#allocation6 + $0x8] sm:$0xff]
    %v193 = vld [vmem:[#allocation6 + $0x10] sm:$0xff]
    %v194 = vld [vmem:[#allocation6 + $0x18] sm:$0xff]
    %v196 = vsel %vm97, %v190, 0
    %198 = vmatprep.subr.mxu0 0.0
    %199 = vmatpush1.msra.mxu0 0.0
    %200 = vmatprep.subr.mxu0 0.0
    %201 = vmatpush1.msra.mxu0 0.0
    %202 = vmatprep.subr.mxu0 0.0
    %203 = vmatpush1.msra.mxu0 0.0
    %204 = vmatprep.subr.mxu0 0.0
    %205 = vmatpush1.msra.mxu0 0.0
    %206 = vmatprep.subr.mxu0 0.0
    %207 = vmatpush1.msra.mxu0 0.0
    %208 = vmatprep.subr.mxu0 0.0
    %209 = vmatpush1.msra.mxu0 0.0
    %210 = vmatprep.subr.mxu0 0.0
    %211 = vmatpush1.msra.mxu0 0.0
    %212 = vmatprep.subr.mxu0 0.0
    %213 = vmatpush1.msra.mxu0 0.0
    %214 = vmatprep.subr.mxu0 0.0
    %215 = vmatpush1.msra.mxu0 0.0
    %216 = vmatprep.subr.mxu0 0.0
    %217 = vmatpush1.msra.mxu0 0.0
    %218 = vmatprep.subr.mxu0 0.0
    %219 = vmatpush1.msra.mxu0 0.0
    %220 = vmatprep.subr.mxu0 0.0
    %221 = vmatpush1.msra.mxu0 0.0
    %222 = vmatprep.subr.mxu0 0.0
    %223 = vmatpush1.msra.mxu0 %v194
    %224 = vmatprep.subr.mxu0 0.0
    %225 = vmatpush1.msra.mxu0 %v193
    %226 = vmatprep.subr.mxu0 0.0
    %227 = vmatpush1.msra.mxu0 %v192
    %228 = vmatprep.subr.mxu0 0.0
    %229 = vmatpush1.msra.mxu0 %v191
    %230 = vmatprep.subr.mxu0 0.0
    %231 = vmatpush2.msra.mxu0 0.0
    %232 = vmatprep.subr.mxu0 0.0
    %233 = vmatpush2.msra.mxu0 0.0
    %234 = vmatprep.subr.mxu0 0.0
    %235 = vmatpush2.msra.mxu0 0.0
    %236 = vmatprep.subr.mxu0 0.0
    %237 = vmatpush2.msra.mxu0 0.0
    %238 = vmatprep.subr.mxu0 0.0
    %239 = vmatpush2.msra.mxu0 0.0
    %240 = vmatprep.subr.mxu0 0.0
    %241 = vmatpush2.msra.mxu0 0.0
    %242 = vmatprep.subr.mxu0 0.0
    %243 = vmatpush2.msra.mxu0 0.0
    %244 = vmatprep.subr.mxu0 0.0
    %245 = vmatpush2.msra.mxu0 0.0
    %246 = vmatprep.subr.mxu0 0.0
    %247 = vmatpush2.msra.mxu0 0.0
    %248 = vmatprep.subr.mxu0 0.0
    %249 = vmatpush2.msra.mxu0 0.0
    %250 = vmatprep.subr.mxu0 0.0
    %251 = vmatpush2.msra.mxu0 0.0
    %252 = vmatprep.subr.mxu0 0.0
    %253 = vmatpush2.msra.mxu0 0.0
    %254 = vmatprep.subr.mxu0 0.0
    %255 = vmatpush2.msra.mxu0 0.0
    %256 = vmatprep.subr.mxu0 0.0
    %257 = vmatpush2.msra.mxu0 0.0
    %258 = vmatprep.subr.mxu0 0.0
    %259 = vmatpush2.msra.mxu0 0.0
    %260 = vmatprep.subr.mxu0 0.0
    %261 = vmatpush2.msra.mxu0 0.0
    %262 = vmatprep.mubr.f32.mxu0 0.0
    %263 = vmatmul.mubr.f32.gmra.mxu0 %v196
    %v264 = vpop.f32.mrf.mxu0
    %v265 = vadd.f32 0.0, %v264
    %v266 = vpop.f32.mrf.mxu0
    %267 = vdwg.mxu0
    %v269 = vrot.slane %v265, 6
    %270 = vrot.lane.b32.xlu0 %v269, 80
    %v271 = vpop.permute.xlu0 %270
    %v273 = vsel %vm185, 0.0, %v271
    %275 = vrot.lane.b32.xlu0 %v273, 16
    %v276 = vpop.permute.xlu0 %275
    %v278 = vadd.f32 %v265, %v276
    %v279 = vrot.slane %v265, 2
    %v281 = vsel %vm189, %v279, 0.0
    %283 = vrot.lane.b32.xlu0 %v281, 32
    %v284 = vpop.permute.xlu0 %283
    %v286 = vadd.f32 %v265, %v284
    %288 = vrot.lane.b32.xlu0 %v286, 112
    %v289 = vpop.permute.xlu0 %288
    %v291 = vld [vmem:[%s4] sm:$0x1]
    %v293 = vlaneseq
    %v294 = vshrl.u32 %v293, 7
    %v295 = vsub.s32 0, %v294
    %v296 = vrot.slane %v291, %v295
    %297 = vrot.lane.b32.xlu0 %v296, 16
    %v298 = vpop.permute.xlu0 %297
    %v300 = vadd.f32 %v278, %v298
    %v301 = vadd.f32 %v289, %v298
    %vm302 = vcmask 261248
    %v303 = vsel %vm302, %v300, 0.0
    %v304 = vsel %vm302, %v301, 0.0
    %v305 = vadd.f32 %v303, %v304
    %v306 = vrot.slane %v305, 4
    %v307 = vadd.f32 %v305, %v306
    %v308 = vrot.slane %v307, 2
    %v309 = vadd.f32 %v307, %v308
    %v310 = vrot.slane %v309, 1
    %v311 = vadd.f32 %v309, %v310
    %v312 = vmul.f32 %v311, 0.0625
    %v313 = vmul.f32 %v300, %v300
    %v314 = vmul.f32 %v301, %v301
    %v315 = vsel %vm302, %v313, 0.0
    %v316 = vsel %vm302, %v314, 0.0
    %v317 = vadd.f32 %v315, %v316
    %v318 = vrot.slane %v317, 4
    %v319 = vadd.f32 %v317, %v318
    %v320 = vrot.slane %v319, 2
    %v321 = vadd.f32 %v319, %v320
    %v322 = vrot.slane %v321, 1
    %v323 = vadd.f32 %v321, %v322
    %v324 = vmul.f32 %v323, 0.0625
    %v325 = vmul.f32 %v312, %v312
    %v326 = vsub.f32 %v324, %v325
    %v327 = vadd.f32 %v326, 1e-05
    %v328 = vrsqrt.pop %v327
    %v329 = vld [vmem:[%s5] sm:$0x1]
    %v331 = vlaneseq
    %v332 = vshrl.u32 %v331, 7
    %v333 = vsub.s32 0, %v332
    %v334 = vrot.slane %v329, %v333
    %335 = vrot.lane.b32.xlu0 %v334, 16
    %v336 = vpop.permute.xlu0 %335
    %v338 = vmul.f32 %v328, %v336
    %v339 = vld [vmem:[%s6] sm:$0x1]
    %v340 = vmul.f32 %v312, %v338
    %v343 = vunpack.c.l.s4 1966171168
    %v344 = vunpack.c.0.s8 %v343
    %v345 = vlaneseq
    %v346 = vshrl.u32 %v345, 7
    %v347 = vsub.s32 %v344, %v346
    %v348 = vrot.slane %v340, %v347
    %v350 = vunpack.c.l.s4 1966171168
    %v351 = vunpack.c.0.s8 %v350
    %v352 = vlaneseq
    %v353 = vshrl.u32 %v352, 7
    %v354 = vsub.s32 %v351, %v353
    %v355 = vrot.slane %v348, %v354
    %356 = vrot.lane.b32.xlu0 %v355, 112
    %v357 = vpop.permute.xlu0 %356
    %v359 = vsub.f32 %v339, %v357
    %v360 = vlaneseq
    %v361 = vshrl.u32 %v360, 7
    %v362 = vsub.s32 0, %v361
    %v363 = vrot.slane %v338, %v362
    %v364 = vmul.f32 %v300, %v363
    %v365 = vmul.f32 %v301, %v363
    %v367 = vlaneseq
    %v368 = vshrl.u32 %v367, 7
    %v369 = vsub.s32 0, %v368
    %v370 = vrot.slane %v359, %v369
    %371 = vrot.lane.b32.xlu0 %v370, 16
    %v372 = vpop.permute.xlu0 %371
    %v374 = vadd.f32 %v364, %v372
    %v375 = vadd.f32 %v365, %v372
    %v376 = vmax.f32 %v374, 0.0
    %v377 = vmax.f32 %v375, 0.0
    %v378 = vld [vmem:[#allocation7] sm:$0xff]
    %v379 = vld [vmem:[#allocation7 + $0x8] sm:$0xff]
    %382 = vrot.lane.b32.xlu0 %v376, 112
    %v383 = vpop.permute.xlu0 %382
    %384 = vrot.lane.b32.xlu0 %v377, 112
    %v385 = vpop.permute.xlu0 %384
    %vm386 = vcmask 130048
    %v387 = vsel %vm386, %v383, 0
    %v389 = vsel %vm386, %v385, 0
    %391 = vmatprep.subr.mxu0 0.0
    %392 = vmatpush1.msra.mxu0 0.0
    %393 = vmatprep.subr.mxu0 0.0
    %394 = vmatpush1.msra.mxu0 0.0
    %395 = vmatprep.subr.mxu0 0.0
    %396 = vmatpush1.msra.mxu0 0.0
    %397 = vmatprep.subr.mxu0 0.0
    %398 = vmatpush1.msra.mxu0 0.0
    %399 = vmatprep.subr.mxu0 0.0
    %400 = vmatpush1.msra.mxu0 0.0
    %401 = vmatprep.subr.mxu0 0.0
    %402 = vmatpush1.msra.mxu0 0.0
    %403 = vmatprep.subr.mxu0 0.0
    %404 = vmatpush1.msra.mxu0 0.0
    %405 = vmatprep.subr.mxu0 0.0
    %406 = vmatpush1.msra.mxu0 0.0
    %407 = vmatprep.subr.mxu0 0.0
    %408 = vmatpush1.msra.mxu0 0.0
    %409 = vmatprep.subr.mxu0 0.0
    %410 = vmatpush1.msra.mxu0 0.0
    %411 = vmatprep.subr.mxu0 0.0
    %412 = vmatpush1.msra.mxu0 0.0
    %413 = vmatprep.subr.mxu0 0.0
    %414 = vmatpush1.msra.mxu0 0.0
    %415 = vmatprep.subr.mxu0 0.0
    %416 = vmatpush1.msra.mxu0 0.0
    %417 = vmatprep.subr.mxu0 0.0
    %418 = vmatpush1.msra.mxu0 0.0
    %419 = vmatprep.subr.mxu0 0.0
    %420 = vmatpush1.msra.mxu0 %v379
    %421 = vmatprep.subr.mxu0 0.0
    %422 = vmatpush1.msra.mxu0 %v378
    %423 = vmatprep.subr.mxu0 0.0
    %424 = vmatpush2.msra.mxu0 0.0
    %425 = vmatprep.subr.mxu0 0.0
    %426 = vmatpush2.msra.mxu0 0.0
    %427 = vmatprep.subr.mxu0 0.0
    %428 = vmatpush2.msra.mxu0 0.0
    %429 = vmatprep.subr.mxu0 0.0
    %430 = vmatpush2.msra.mxu0 0.0
    %431 = vmatprep.subr.mxu0 0.0
    %432 = vmatpush2.msra.mxu0 0.0
    %433 = vmatprep.subr.mxu0 0.0
    %434 = vmatpush2.msra.mxu0 0.0
    %435 = vmatprep.subr.mxu0 0.0
    %436 = vmatpush2.msra.mxu0 0.0
    %437 = vmatprep.subr.mxu0 0.0
    %438 = vmatpush2.msra.mxu0 0.0
    %439 = vmatprep.subr.mxu0 0.0
    %440 = vmatpush2.msra.mxu0 0.0
    %441 = vmatprep.subr.mxu0 0.0
    %442 = vmatpush2.msra.mxu0 0.0
    %443 = vmatprep.subr.mxu0 0.0
    %444 = vmatpush2.msra.mxu0 0.0
    %445 = vmatprep.subr.mxu0 0.0
    %446 = vmatpush2.msra.mxu0 0.0
    %447 = vmatprep.subr.mxu0 0.0
    %448 = vmatpush2.msra.mxu0 0.0
    %449 = vmatprep.subr.mxu0 0.0
    %450 = vmatpush2.msra.mxu0 0.0
    %451 = vmatprep.subr.mxu0 0.0
    %452 = vmatpush2.msra.mxu0 0.0
    %453 = vmatprep.subr.mxu0 0.0
    %454 = vmatpush2.msra.mxu0 0.0
    %455 = vmatprep.mubr.f32.mxu0 0.0
    %456 = vmatmul.mubr.f32.gmra.mxu0 %v387
    %v457 = vpop.f32.mrf.mxu0
    %v458 = vadd.f32 0.0, %v457
    %v459 = vpop.f32.mrf.mxu0
    %460 = vmatprep.mubr.f32.mxu0 0.0
    %461 = vmatmul.mubr.f32.gmra.mxu0 %v389
    %v462 = vpop.f32.mrf.mxu0
    %v463 = vadd.f32 0.0, %v462
    %v464 = vpop.f32.mrf.mxu0
    %465 = vdwg.mxu0
    %v467 = vrot.slane %v463, 6
    %468 = vrot.lane.b32.xlu0 %v467, 116
    %v469 = vpop.permute.xlu0 %468
    %v471 = vsel %vm185, 0.0, %v469
    %473 = vrot.lane.b32.xlu0 %v471, 4
    %v474 = vpop.permute.xlu0 %473
    %v476 = vadd.f32 %v458, %v474
    %477 = vrot.lane.b32.xlu0 %v463, 8
    %v478 = vpop.permute.xlu0 %477
    %v480 = vadd.f32 %v458, %v478
    %482 = vrot.lane.b32.xlu0 %v458, 120
    %v483 = vpop.permute.xlu0 %482
    %v485 = vadd.f32 %v463, %v483
    %v486 = vrot.slane %v458, 2
    %v488 = vsel %vm189, %v486, 0.0
    %490 = vrot.lane.b32.xlu0 %v488, 8
    %v491 = vpop.permute.xlu0 %490
    %v493 = vadd.f32 %v463, %v491
    %495 = vrot.lane.b32.xlu0 %v480, 124
    %v496 = vpop.permute.xlu0 %495
    %499 = vrot.lane.b32.xlu0 %v493, 124
    %v500 = vpop.permute.xlu0 %499
    %v502 = vld [vmem:[%s8] sm:$0x1]
    %v504 = vlaneseq
    %v505 = vshrl.u32 %v504, 7
    %v506 = vsub.s32 0, %v505
    %v507 = vrot.slane %v502, %v506
    %508 = vrot.lane.b32.xlu0 %v507, 4
    %v509 = vpop.permute.xlu0 %508
    %v511 = vadd.f32 %v476, %v509
    %v512 = vadd.f32 %v496, %v509
    %v513 = vadd.f32 %v485, %v509
    %v514 = vadd.f32 %v500, %v509
    %v515 = vtanh.pop %v511
    %v516 = vtanh.pop %v512
    %v517 = vtanh.pop %v513
    %v518 = vtanh.pop %v514
    %523 = vrot.lane.b32.xlu0 %v515, 124
    %v524 = vpop.permute.xlu0 %523
    %525 = vrot.lane.b32.xlu0 %v516, 124
    %v526 = vpop.permute.xlu0 %525
    %527 = vrot.lane.b32.xlu0 %v517, 124
    %v528 = vpop.permute.xlu0 %527
    %529 = vrot.lane.b32.xlu0 %v518, 124
    %v530 = vpop.permute.xlu0 %529
    %vm535 = vcmask 31744
    %536 = vst.msk [vmem:[%s9] sm:$0xff] %vm535, %v524
    %537 = vst.msk [vmem:[%s9 + $0x8] sm:$0xff] %vm535, %v526
    %538 = vst.msk [vmem:[%s9 + $0x10] sm:$0xff] %vm535, %v528
    %539 = vst.msk [vmem:[%s9 + $0x18] sm:$0xff] %vm535, %v530
    // Predicated region
    $region54: #{tpu_custom_call.1} parent=1 // pred_check
      _
    $region55: #{tpu_custom_call.1} parent=1 // pred_check_branch
      %541 = sbr.rel (0) target = $region57
    $region56: #{tpu_custom_call.1} parent=1 // pred_region
      _
    $region57: #{tpu_custom_call.1} parent=1 // pred_fallthru
      _
    // Predicated region
    $region58: #{tpu_custom_call.1} parent=1 // pred_check
      _
    $region59: #{tpu_custom_call.1} parent=1 // pred_check_branch
      %543 = sbr.rel (0) target = $region61
    $region60: #{tpu_custom_call.1} parent=1 // pred_region
      _
    $region61: #{tpu_custom_call.1} parent=1 // pred_fallthru
      _
    %544 = vsyncpa [#allocation3], 1
    %545 = vsyncpa [#allocation5], 1
    %546 = vsyncpa [#allocation8], 1

</llo_original>
